<compile_context>
chip_gen: v7x
topology: tpu7x:2x2x1
jax: 0.10.0
libtpu: 0.0.40
codegen_flags: <defaults>
</compile_context>

<pallas_src>
import functools

import jax
import jax.numpy as jnp
from jax import lax
from jax.experimental import pallas as pl
from jax.experimental.pallas import tpu as pltpu


def _round_up(a: int, b: int) -> int:
    return (a + b - 1) // b * b


def _gelu(h, tanh_approx):
    if tanh_approx:
        # tanh-approx GELU: transcendental lands on the EUP slot instead of a
        # long VPU erf polynomial (perf knob for v6e/v7x; slightly different
        # numerics from the exact torch GELU, so off by default).
        return 0.5 * h * (1.0 + jnp.tanh(
            0.7978845608028654 * (h + 0.044715 * h * h * h)))
    # Exact GELU: x * 0.5 * (1 + erf(x / sqrt(2)))  (matches UNITER's GELU)
    return 0.5 * h * (1.0 + lax.erf(h * 0.7071067811865476))


def _layer_norm(h, gamma, beta):
    # LayerNorm over last dim, eps=1e-12, biased variance (matches torch)
    mean = jnp.mean(h, axis=-1, keepdims=True)
    c = h - mean
    var = jnp.mean(c * c, axis=-1, keepdims=True)
    return c * lax.rsqrt(var + 1e-12) * gamma + beta


def _emo_cls_resident_kernel(x_ref, w1_ref, ln_ref, w2_ref, b2_ref, o_ref, *,
                             tanh_gelu):
    # x tile: (tile_n, H); w1 fully resident in VMEM.  MXU runs in the weight
    # dtype (bf16 default) with f32 accumulation; elementwise math stays f32.
    lnp = ln_ref[...]                                    # (3, H): b1, gamma, beta
    x = x_ref[...].astype(w1_ref.dtype)                  # no-op if x already bf16
    h = jnp.dot(x, w1_ref[...], preferred_element_type=jnp.float32) + lnp[0:1, :]
    h = _gelu(h, tanh_gelu)
    hn = _layer_norm(h, lnp[1:2, :], lnp[2:3, :])
    out = jnp.dot(hn.astype(w2_ref.dtype), w2_ref[...],
                  preferred_element_type=jnp.float32) + b2_ref[...]
    o_ref[...] = out.astype(o_ref.dtype)


def _emo_cls_ktiled_kernel(x_ref, w1_ref, ln_ref, w2_ref, b2_ref, o_ref,
                           acc_ref, *, tanh_gelu):
    # Streams w1 as (tk, H) blocks over a trailing reduction axis; used when a
    # resident w1 would not fit VMEM (large hidden sizes on v7x's 64 MiB).
    k = pl.program_id(1)

    @pl.when(k == 0)
    def _():
        acc_ref[...] = jnp.zeros_like(acc_ref)

    x = x_ref[...].astype(w1_ref.dtype)
    acc_ref[...] += jnp.dot(x, w1_ref[...], preferred_element_type=jnp.float32)

    @pl.when(k == pl.num_programs(1) - 1)
    def _():
        lnp = ln_ref[...]                                # (3, H): b1, gamma, beta
        h = _gelu(acc_ref[...] + lnp[0:1, :], tanh_gelu)
        hn = _layer_norm(h, lnp[1:2, :], lnp[2:3, :])
        out = jnp.dot(hn.astype(w2_ref.dtype), w2_ref[...],
                      preferred_element_type=jnp.float32) + b2_ref[...]
        o_ref[...] = out.astype(o_ref.dtype)


def prepare_emo_params(params, matmul_dtype=jnp.bfloat16):
    """One-time weight preparation (do NOT redo per forward call): casts the
    matmul weights to the MXU dtype, pads the label dim to a lane-dense
    multiple of 128 and folds b1/gamma/beta into one (3, H) resident block."""
    H = params["w1"].shape[0]
    L = params["w2"].shape[1]
    L_pad = _round_up(L, 128)
    w2 = params["w2"].astype(matmul_dtype)
    b2 = params["b2"].reshape(1, L).astype(jnp.float32)
    if L_pad != L:
        w2 = jnp.pad(w2, ((0, 0), (0, L_pad - L)))
        b2 = jnp.pad(b2, ((0, 0), (0, L_pad - L)))
    ln = jnp.stack([params["b1"], params["gamma"], params["beta"]], axis=0)
    return {
        "w1": params["w1"].astype(matmul_dtype),          # (H, H)
        "ln": ln.astype(jnp.float32),                     # (3, H)
        "w2": w2,                                         # (H, L_pad)
        "b2": b2,                                         # (1, L_pad)
        "label_dim": L,
    }
    # TODO(synk): optional fp8 weight path for v7x (fp8 MXU, halves resident
    # weight VMEM) once accuracy is validated against the torch reference.


def _vmem_capacity_bytes():
    # Hardware query only; conservative (v7x-sized) fallback if unavailable.
    cap = None
    try:
        info = pltpu.get_tpu_info()
        cap = getattr(info, "vmem_capacity_bytes", None)
    except Exception:
        cap = None
    if not cap:
        cap = 64 * 1024 * 1024
    return int(cap)


def _auto_k_tile(H, itemsize_w, vmem_limit_bytes):
    """Stream w1 over a K-reduction axis only when keeping it resident would
    eat too much of the VMEM budget (e.g. H >= ~3072 bf16 on v7x)."""
    w1_bytes = H * H * itemsize_w
    if w1_bytes <= vmem_limit_bytes // 3:
        return None                       # resident path
    if H % 128 != 0:
        # TODO(synk): support streaming w1 for hidden sizes that are not a
        # multiple of 128 (needs K padding); keep it resident for now.
        return None
    budget = vmem_limit_bytes // 4        # double-buffered (tk, H) w1 blocks
    tk = 128
    for m in range(H // 128, 0, -1):
        cand = 128 * m
        if H % cand == 0 and 2 * cand * H * itemsize_w <= budget:
            tk = cand
            break
    return tk


def emo_classification_forward(x, prepared, *, tile_n=None, k_tile="auto",
                               tanh_gelu=False, vmem_limit_bytes=None,
                               min_grid_steps=4):
    """x: (N, H) tokens, f32 or bf16 (bf16 accepted directly, no wrapper cast).
    prepared: output of prepare_emo_params.  Returns (N, label_dim) in x.dtype."""
    N, H = x.shape
    w1, ln, w2, b2 = prepared["w1"], prepared["ln"], prepared["w2"], prepared["b2"]
    L = prepared["label_dim"]
    L_pad = w2.shape[1]
    assert w1.shape == (H, H) and w2.shape[0] == H

    vmem_cap = _vmem_capacity_bytes()
    if vmem_limit_bytes is None:
        # Headroom below physical VMEM for compiler scratch / f32 temporaries:
        # ~48 MiB on v7x (64 MiB/TC), ~96 MiB on v5e/v6e (128 MiB).
        vmem_limit_bytes = (vmem_cap * 3) // 4
    if tile_n is None:
        # Bigger row tiles amortize the ~0.35us/step pipeline overhead; v7x's
        # smaller VMEM keeps the default at 256, v5e/v6e take 512.
        tile_n = 256 if vmem_cap <= 96 * 1024 * 1024 else 512

    # Pad-free row tiling: shrink the tile so the grid has >= min_grid_steps
    # steps when N allows it (both v7x TensorCores get work under "parallel").
    target = _round_up(max(1, pl.cdiv(N, min_grid_steps)), 8)
    tile_n_eff = max(8, min(_round_up(tile_n, 8), target))
    grid_rows = pl.cdiv(N, tile_n_eff)

    itemsize_w = w1.dtype.itemsize
    if isinstance(k_tile, str):           # "auto"
        k_tile = _auto_k_tile(H, itemsize_w, vmem_limit_bytes)
    if k_tile is not None:
        k_tile = min(int(k_tile), H)
        if H % k_tile != 0 or (k_tile < H and k_tile % 128 != 0):
            raise ValueError(f"k_tile={k_tile} must divide H={H} and be a "
                             "multiple of 128 (or equal H)")
    use_ktiled = k_tile is not None

    cost = pl.CostEstimate(
        flops=2 * N * H * (H + L_pad),
        transcendentals=N * H,                               # GELU erf/tanh
        bytes_accessed=(N * H * x.dtype.itemsize             # x read
                        + (grid_rows if use_ktiled else 1) * H * H * itemsize_w
                        + H * L_pad * itemsize_w             # w2
                        + (3 * H + L_pad) * 4                # ln params, b2
                        + N * L_pad * x.dtype.itemsize))     # output write

    def call(weight_mode):
        def inv(shape):
            # Grid-invariant blocks (weights / biases / LN params).
            kwargs = {} if weight_mode is None else {"pipeline_mode": weight_mode}
            return pl.BlockSpec(shape, lambda *_: (0,) * len(shape), **kwargs)

        if not use_ktiled:
            kernel = functools.partial(_emo_cls_resident_kernel,
                                       tanh_gelu=tanh_gelu)
            grid = (grid_rows,)
            in_specs = [
                pl.BlockSpec((tile_n_eff, H), lambda i: (i, 0)),   # x tile
                inv((H, H)),        # w1 (resident)
                inv((3, H)),        # b1 / gamma / beta
                inv((H, L_pad)),    # w2 (lane-padded)
                inv((1, L_pad)),    # b2
            ]
            out_specs = pl.BlockSpec((tile_n_eff, L_pad), lambda i: (i, 0))
            scratch = []
            dims = ("parallel",)
        else:
            kernel = functools.partial(_emo_cls_ktiled_kernel,
                                       tanh_gelu=tanh_gelu)
            grid = (grid_rows, H // k_tile)                    # reduction last
            in_specs = [
                pl.BlockSpec((tile_n_eff, k_tile), lambda i, k: (i, k)),  # x
                pl.BlockSpec((k_tile, H), lambda i, k: (k, 0)),   # w1 streamed
                inv((3, H)),
                inv((H, L_pad)),
                inv((1, L_pad)),
            ]
            out_specs = pl.BlockSpec((tile_n_eff, L_pad), lambda i, k: (i, 0))
            scratch = [pltpu.VMEM((tile_n_eff, H), jnp.float32)]
            dims = ("parallel", "arbitrary")

        return pl.pallas_call(
            kernel,
            out_shape=jax.ShapeDtypeStruct((N, L_pad), x.dtype),
            grid_spec=pltpu.PrefetchScalarGridSpec(
                num_scalar_prefetch=0,
                grid=grid,
                in_specs=in_specs,
                out_specs=out_specs,
                scratch_shapes=scratch,
            ),
            compiler_params=pltpu.CompilerParams(
                dimension_semantics=dims,
                vmem_limit_bytes=vmem_limit_bytes),
            cost_estimate=cost,
        )(x, w1, ln, w2, b2)

    # Single-buffer the grid-invariant weight blocks: they never change across
    # the grid, so double-buffering only wastes VMEM (matters most on v7x).
    single = None
    if hasattr(pl, "Buffered"):
        try:
            single = pl.Buffered(1)
        except (TypeError, ValueError):
            single = None

    if single is None:
        out = call(None)
    else:
        retry_errs = (TypeError, NotImplementedError, ValueError)
        if hasattr(pltpu, "LoweringException"):
            retry_errs = retry_errs + (pltpu.LoweringException,)
        try:
            out = call(single)
        except retry_errs:
            # TODO(synk): drop once Buffered(1) pipeline_mode is supported
            # everywhere; default double-buffering is also correct, just uses
            # more VMEM for the resident weights.
            out = call(None)

    # Row dimension needs no slice (pad-free grid); only drop the lane padding
    # of the (small) label dim when present.
    return out if L_pad == L else out[:, :L]


def init_params(key, hidden_size, label_dim):
    k1, k2, k3, k4 = jax.random.split(key, 4)
    scale = 0.02
    return {
        "w1": scale * jax.random.normal(k1, (hidden_size, hidden_size), jnp.float32),
        "b1": scale * jax.random.normal(k2, (hidden_size,), jnp.float32),
        "gamma": jnp.ones((hidden_size,), jnp.float32),
        "beta": jnp.zeros((hidden_size,), jnp.float32),
        "w2": scale * jax.random.normal(k3, (hidden_size, label_dim), jnp.float32),
        "b2": scale * jax.random.normal(k4, (label_dim,), jnp.float32),
    }


def reference_forward(x, params):
    h = x @ params["w1"] + params["b1"]
    h = 0.5 * h * (1.0 + lax.erf(h / jnp.sqrt(2.0)))
    mean = jnp.mean(h, axis=-1, keepdims=True)
    var = jnp.mean((h - mean) ** 2, axis=-1, keepdims=True)
    hn = (h - mean) / jnp.sqrt(var + 1e-12)
    hn = hn * params["gamma"] + params["beta"]
    return hn @ params["w2"] + params["b2"]


if __name__ == "__main__":
    # Small shapes consistent with the module: batch=2, seq=8, hidden=32, labels=8
    batch, seq, hidden, label_dim = 2, 8, 32, 8
    key = jax.random.PRNGKey(0)
    kx, kp = jax.random.split(key)

    x = jax.random.normal(kx, (batch, seq, hidden), jnp.float32)
    params = init_params(kp, hidden, label_dim)

    # flatten (batch, seq, hidden) -> (N, hidden) tokens (glue in plain JAX)
    x2d = x.reshape(batch * seq, hidden)
    ref = reference_forward(x2d, params)

    # 1) f32-matmul path: tight semantic check against the reference
    prep_f32 = prepare_emo_params(params, matmul_dtype=jnp.float32)
    out_f32 = jax.block_until_ready(emo_classification_forward(x2d, prep_f32))
    assert out_f32.shape == (batch * seq, label_dim)
    assert jnp.allclose(out_f32, ref, atol=5e-4, rtol=5e-4), "f32 path mismatch"

    # 2) default perf path: bf16 MXU inputs with f32 accumulation (weights
    #    prepared once, outside the forward call)
    prep_bf16 = prepare_emo_params(params)
    out = jax.block_until_ready(emo_classification_forward(x2d, prep_bf16))
    assert out.shape == (batch * seq, label_dim)
    assert jnp.allclose(out, ref, atol=2e-2, rtol=2e-2), "bf16 path mismatch"

    # 3) K-tiled w1 path (forced; auto-enables only for large hidden sizes)
    out_kt = jax.block_until_ready(
        emo_classification_forward(x2d, prep_f32, k_tile=hidden))
    assert jnp.allclose(out_kt, ref, atol=5e-4, rtol=5e-4), "k-tiled path mismatch"

    # 4) K-tiled path with >1 reduction step at a slightly larger hidden size
    hidden2 = 256
    params2 = init_params(jax.random.PRNGKey(1), hidden2, label_dim)
    x2 = jax.random.normal(jax.random.PRNGKey(2), (batch * seq, hidden2), jnp.float32)
    ref2 = reference_forward(x2, params2)
    prep2 = prepare_emo_params(params2, matmul_dtype=jnp.float32)
    out2 = jax.block_until_ready(
        emo_classification_forward(x2, prep2, k_tile=128))
    assert out2.shape == (batch * seq, label_dim)
    assert jnp.allclose(out2, ref2, atol=2e-3, rtol=2e-3), "k-tiled multi-step mismatch"

    print("KERNEL_OK")
</pallas_src>

<mosaic_0001>
module attributes {stable_mosaic.version = 11 : i64} {
  func.func @_emo_cls_resident_kernel(%arg0: i32, %arg1: memref<8x32xf32, #tpu.memory_space<vmem>>, %arg2: memref<32x32xf32, #tpu.memory_space<vmem>>, %arg3: memref<3x32xf32, #tpu.memory_space<vmem>>, %arg4: memref<32x128xf32, #tpu.memory_space<vmem>>, %arg5: memref<1x128xf32, #tpu.memory_space<vmem>>, %arg6: memref<8x128xf32, #tpu.memory_space<vmem>>) attributes {dimension_semantics = [#tpu.dimension_semantics<parallel>], iteration_bounds = array<i64: 2>, scalar_prefetch = 0 : i64, scratch_operands = 0 : i64, tpu.core_type = #tpu.core_type<tc>, window_params = [{transform_indices = @transform_0, window_bounds = array<i64: 8, 32>}, {pipeline_mode = #tpu.pipeline_mode<synchronous>, transform_indices = @transform_1, window_bounds = array<i64: 32, 32>}, {pipeline_mode = #tpu.pipeline_mode<synchronous>, transform_indices = @transform_2, window_bounds = array<i64: 3, 32>}, {pipeline_mode = #tpu.pipeline_mode<synchronous>, transform_indices = @transform_3, window_bounds = array<i64: 32, 128>}, {pipeline_mode = #tpu.pipeline_mode<synchronous>, transform_indices = @transform_4, window_bounds = array<i64: 1, 128>}, {transform_indices = @transform_5, window_bounds = array<i64: 8, 128>}]} {
    %c0 = arith.constant 0 : index
    %c0_0 = arith.constant 0 : index
    %0 = vector.load %arg3[%c0, %c0_0] : memref<3x32xf32, #tpu.memory_space<vmem>>, vector<3x32xf32>
    %c0_1 = arith.constant 0 : index
    %c0_2 = arith.constant 0 : index
    %1 = vector.load %arg1[%c0_1, %c0_2] : memref<8x32xf32, #tpu.memory_space<vmem>>, vector<8x32xf32>
    %c0_3 = arith.constant 0 : index
    %c0_4 = arith.constant 0 : index
    %2 = vector.load %arg2[%c0_3, %c0_4] : memref<32x32xf32, #tpu.memory_space<vmem>>, vector<32x32xf32>
    %cst = arith.constant dense<0.000000e+00> : vector<8x32xf32>
    %3 = tpu.matmul %1, %2, %cst {dimension_numbers = #tpu.dot_dimension_numbers<[1], [0], [0], [1], [0, 0, 1, 1], [], []>} : vector<8x32xf32>, vector<32x32xf32>, vector<8x32xf32> -> vector<8x32xf32>
    %4 = vector.extract_strided_slice %0 {offsets = [0, 0], sizes = [1, 32], strides = [1, 1]} : vector<3x32xf32> to vector<1x32xf32>
    %5 = vector.broadcast %4 : vector<1x32xf32> to vector<8x32xf32>
    %6 = arith.addf %3, %5 : vector<8x32xf32>
    %cst_5 = arith.constant 5.000000e-01 : f32
    %7 = vector.broadcast %cst_5 : f32 to vector<8x32xf32>
    %8 = arith.mulf %7, %6 : vector<8x32xf32>
    %cst_6 = arith.constant 0.707106769 : f32
    %9 = vector.broadcast %cst_6 : f32 to vector<8x32xf32>
    %10 = arith.mulf %6, %9 : vector<8x32xf32>
    %11 = math.erf %10 : vector<8x32xf32>
    %cst_7 = arith.constant 1.000000e+00 : f32
    %12 = vector.broadcast %cst_7 : f32 to vector<8x32xf32>
    %13 = arith.addf %12, %11 : vector<8x32xf32>
    %14 = arith.mulf %8, %13 : vector<8x32xf32>
    %15 = vector.extract_strided_slice %0 {offsets = [1, 0], sizes = [1, 32], strides = [1, 1]} : vector<3x32xf32> to vector<1x32xf32>
    %16 = vector.extract_strided_slice %0 {offsets = [2, 0], sizes = [1, 32], strides = [1, 1]} : vector<3x32xf32> to vector<1x32xf32>
    %cst_8 = arith.constant dense<0.000000e+00> : vector<8xf32>
    %17 = vector.multi_reduction <add>, %14, %cst_8 [1] : vector<8x32xf32> to vector<8xf32>
    %18 = vector.shape_cast %17 : vector<8xf32> to vector<8x1xf32>
    %cst_9 = arith.constant 3.200000e+01 : f32
    %19 = vector.broadcast %cst_9 : f32 to vector<8x1xf32>
    %20 = arith.divf %18, %19 : vector<8x1xf32>
    %21 = vector.broadcast %20 : vector<8x1xf32> to vector<8x32xf32>
    %22 = arith.subf %14, %21 : vector<8x32xf32>
    %23 = arith.mulf %22, %22 : vector<8x32xf32>
    %cst_10 = arith.constant dense<0.000000e+00> : vector<8xf32>
    %24 = vector.multi_reduction <add>, %23, %cst_10 [1] : vector<8x32xf32> to vector<8xf32>
    %25 = vector.shape_cast %24 : vector<8xf32> to vector<8x1xf32>
    %cst_11 = arith.constant 3.200000e+01 : f32
    %26 = vector.broadcast %cst_11 : f32 to vector<8x1xf32>
    %27 = arith.divf %25, %26 : vector<8x1xf32>
    %cst_12 = arith.constant 9.99999996E-13 : f32
    %28 = vector.broadcast %cst_12 : f32 to vector<8x1xf32>
    %29 = arith.addf %27, %28 : vector<8x1xf32>
    %30 = math.rsqrt %29 : vector<8x1xf32>
    %31 = vector.broadcast %30 : vector<8x1xf32> to vector<8x32xf32>
    %32 = arith.mulf %22, %31 : vector<8x32xf32>
    %33 = vector.broadcast %15 : vector<1x32xf32> to vector<8x32xf32>
    %34 = arith.mulf %32, %33 : vector<8x32xf32>
    %35 = vector.broadcast %16 : vector<1x32xf32> to vector<8x32xf32>
    %36 = arith.addf %34, %35 : vector<8x32xf32>
    %c0_13 = arith.constant 0 : index
    %c0_14 = arith.constant 0 : index
    %37 = vector.load %arg4[%c0_13, %c0_14] : memref<32x128xf32, #tpu.memory_space<vmem>>, vector<32x128xf32>
    %cst_15 = arith.constant dense<0.000000e+00> : vector<8x128xf32>
    %38 = tpu.matmul %36, %37, %cst_15 {dimension_numbers = #tpu.dot_dimension_numbers<[1], [0], [0], [1], [0, 0, 1, 1], [], []>} : vector<8x32xf32>, vector<32x128xf32>, vector<8x128xf32> -> vector<8x128xf32>
    %c0_16 = arith.constant 0 : index
    %c0_17 = arith.constant 0 : index
    %39 = vector.load %arg5[%c0_16, %c0_17] : memref<1x128xf32, #tpu.memory_space<vmem>>, vector<1x128xf32>
    %40 = vector.broadcast %39 : vector<1x128xf32> to vector<8x128xf32>
    %41 = arith.addf %38, %40 : vector<8x128xf32>
    %c0_18 = arith.constant 0 : index
    %c0_19 = arith.constant 0 : index
    %42 = vector.load %arg6[%c0_18, %c0_19] : memref<8x128xf32, #tpu.memory_space<vmem>>, vector<8x128xf32>
    tpu.vector_store %arg6[%c0_18, %c0_19], %41 {strides = array<i32>} : memref<8x128xf32, #tpu.memory_space<vmem>>, vector<8x128xf32>,
    return
  }
  func.func @transform_0(%arg0: i32) -> (i32, i32) {
    %c0_i32 = arith.constant 0 : i32
    %c0_i32_0 = arith.constant 0 : i32
    return %arg0, %c0_i32 : i32, i32
  }
  func.func @transform_1(%arg0: i32) -> (i32, i32) {
    %c0_i32 = arith.constant 0 : i32
    %c0_i32_0 = arith.constant 0 : i32
    %c0_i32_1 = arith.constant 0 : i32
    return %c0_i32, %c0_i32_0 : i32, i32
  }
  func.func @transform_2(%arg0: i32) -> (i32, i32) {
    %c0_i32 = arith.constant 0 : i32
    %c0_i32_0 = arith.constant 0 : i32
    %c0_i32_1 = arith.constant 0 : i32
    return %c0_i32, %c0_i32_0 : i32, i32
  }
  func.func @transform_3(%arg0: i32) -> (i32, i32) {
    %c0_i32 = arith.constant 0 : i32
    %c0_i32_0 = arith.constant 0 : i32
    %c0_i32_1 = arith.constant 0 : i32
    return %c0_i32, %c0_i32_0 : i32, i32
  }
  func.func @transform_4(%arg0: i32) -> (i32, i32) {
    %c0_i32 = arith.constant 0 : i32
    %c0_i32_0 = arith.constant 0 : i32
    %c0_i32_1 = arith.constant 0 : i32
    return %c0_i32, %c0_i32_0 : i32, i32
  }
  func.func @transform_5(%arg0: i32) -> (i32, i32) {
    %c0_i32 = arith.constant 0 : i32
    %c0_i32_0 = arith.constant 0 : i32
    return %arg0, %c0_i32 : i32, i32
  }
}

</mosaic_0001>

<llo_original>
// kernel: tpu_custom_call.1
$region0: #{tpu_custom_call.1}
  #allocation0 [shape = 'u32[]', space=smem, size = 0x4, offset = 0x4, fixed_abs, tag = 'smem constant byte address 0x4 - core index']
  #allocation1 [shape = 'u32[144,128]{1,0:T(1,128)}', space=vmem, size = 0x12000, scoped, tag = 'internal scratch']
  %s0 = inlined_call_operand.hbm [shape: f32[16,32], index: 0, kind: input, shape index: {}]
  %s1 = inlined_call_operand.hbm [shape: f32[32,32], index: 1, kind: input, shape index: {}]
  %s2 = inlined_call_operand.vmem [shape: f32[3,32], index: 2, kind: input, shape index: {}]
  %s3 = inlined_call_operand.hbm [shape: f32[32,128], index: 3, kind: input, shape index: {}]
  %s4 = inlined_call_operand.vmem [shape: f32[1,128], index: 4, kind: input, shape index: {}]
  %s5 = inlined_call_operand.hbm [shape: f32[16,128], index: 5, kind: output, shape index: {}]
  %s6 = sld [smem:[#allocation0]]
  $region65: #{tpu_custom_call.1} parent=0
    _
  %s8 = ssub.s32 1, %s6
  %s9 = scalar_select 0, %s8, %s6
  $region1: #{tpu_custom_call.1} parent=0
    #allocation2 [shape = 'u8[8192]{0}', space=vmem, size = 0x2000, scoped, tag = 'input window, operand 0']
    #allocation3 [shape = 's32[2]{0}', space=sflag, size = 0x8, scoped, tag = 'scoped memory for tpu_custom_call.1']
    #allocation4 [shape = 's32[2]{0}', space=sflag, size = 0x8, scoped, tag = 'scoped memory for tpu_custom_call.1']
    #allocation5 [shape = 'u8[16384]{0}', space=vmem, size = 0x4000, scoped, tag = 'input window, operand 1, single buffered']
    #allocation6 [shape = 's32[1]{0}', space=sflag, size = 0x4, scoped, tag = 'scoped memory for tpu_custom_call.1']
    #allocation7 [shape = 'u8[16384]{0}', space=vmem, size = 0x4000, scoped, tag = 'input window, operand 3, single buffered']
    #allocation8 [shape = 'u8[8192]{0}', space=vmem, size = 0x2000, scoped, tag = 'output window, operand 0']
    %10 = vsyncpa [#allocation3], 0
    %s11 = scalar_lea.sflag [#allocation3], 1
    %12 = vsyncpa %s11, 0
    %13 = vsyncpa [#allocation6], 0
    %14 = vsyncpa [#allocation4], 0
    %s15 = scalar_lea.sflag [#allocation4], 1
    %16 = vsyncpa %s15, 0
    loop: start=0, step=1, limit=4
    $region2: #{tpu_custom_call.1} parent=1 // loop_pre_header
      _
    $region3: #{tpu_custom_call.1} parent=1 // loop_header
      %s18 = sphi 0, %s22
      %p19 = scmp.ge.s32.totalorder %s18, 4
      %s28 = sphi 0, %s30
      %s31 = sphi 0, %s28
      %s32 = sphi 0, %s31
      %s48 = sphi 0, %s32
      %s52 = sphi 0, %s52
      %s54 = sphi 0, %s52
      %s55 = sphi 0, %s54
      %s69 = sphi 0, %s55
      %s73 = sphi 0, %s73
      %s75 = sphi 0, %s73
      %s76 = sphi 0, %s75
      %s90 = sphi 0, %s76
      %s94 = sphi 0, %s94
      %s96 = sphi 0, %s94
      %s97 = sphi 0, %s96
      %s111 = sphi 0, %s97
      %s115 = sphi 0, %s115
      %s117 = sphi 0, %s115
      %s118 = sphi 0, %s117
      %s132 = sphi 0, %s118
      %s138 = sphi 0, %s140
      %s141 = sphi 0, %s138
      %s142 = sphi 0, %s141
      %s158 = sphi 0, %s142
    $region4: #{tpu_custom_call.1} parent=1 // loop_header_branch
      %21 = sbr.rel (%p19) target = $region8
    $region5: #{tpu_custom_call.1} parent=1 // loop_body
      %s23 = ssub.s32 %s18, 1
      %s24 = ssub.s32 %s18, 2
      %s25 = sadd.s32 %s18, 1
      %s26 = ssub.s32 %s18, %s25
      %p27 = scmp.eq.s32.totalorder %s26, 0
      %s29 = sadd.s32 %s28, 1
      %s30 = scalar_select %p27, %s28, %s29
      %p33 = pneg %p27
      %p34 = scmp.eq.s32.totalorder %s18, 1
      %p35 = por %p33, %p34
      %p36 = scmp.ne.s32.totalorder %s28, %s31
      %p37 = scmp.eq.s32.totalorder %s18, 0
      %p38 = por %p36, %p37
      %p39 = scmp.ne.s32.totalorder %s28, %s31
      %p40 = scmp.eq.s32.totalorder %s23, 1
      %p41 = por %p39, %p40
      %p42 = scmp.ne.s32.totalorder %s31, %s32
      %p43 = scmp.eq.s32.totalorder %s23, 0
      %p44 = por %p42, %p43
      %p45 = scmp.ne.s32.totalorder %s31, %s32
      %p46 = scmp.eq.s32.totalorder %s24, 1
      %p47 = por %p45, %p46
      %p49 = scmp.ne.s32.totalorder %s32, %s48
      %p50 = scmp.eq.s32.totalorder %s24, 0
      %p51 = por %p49, %p50
      %s53 = sadd.s32 %s52, 1
      %p56 = scmp.eq.s32.totalorder %s18, 1
      %p57 = scmp.ne.s32.totalorder %s52, %s54
      %p58 = scmp.eq.s32.totalorder %s18, 0
      %p59 = por %p57, %p58
      %p60 = scmp.ne.s32.totalorder %s52, %s54
      %p61 = scmp.eq.s32.totalorder %s23, 1
      %p62 = por %p60, %p61
      %p63 = scmp.ne.s32.totalorder %s54, %s55
      %p64 = scmp.eq.s32.totalorder %s23, 0
      %p65 = por %p63, %p64
      %p66 = scmp.ne.s32.totalorder %s54, %s55
      %p67 = scmp.eq.s32.totalorder %s24, 1
      %p68 = por %p66, %p67
      %p70 = scmp.ne.s32.totalorder %s55, %s69
      %p71 = scmp.eq.s32.totalorder %s24, 0
      %p72 = por %p70, %p71
      %s74 = sadd.s32 %s73, 1
      %p77 = scmp.eq.s32.totalorder %s18, 1
      %p78 = scmp.ne.s32.totalorder %s73, %s75
      %p79 = scmp.eq.s32.totalorder %s18, 0
      %p80 = por %p78, %p79
      %p81 = scmp.ne.s32.totalorder %s73, %s75
      %p82 = scmp.eq.s32.totalorder %s23, 1
      %p83 = por %p81, %p82
      %p84 = scmp.ne.s32.totalorder %s75, %s76
      %p85 = scmp.eq.s32.totalorder %s23, 0
      %p86 = por %p84, %p85
      %p87 = scmp.ne.s32.totalorder %s75, %s76
      %p88 = scmp.eq.s32.totalorder %s24, 1
      %p89 = por %p87, %p88
      %p91 = scmp.ne.s32.totalorder %s76, %s90
      %p92 = scmp.eq.s32.totalorder %s24, 0
      %p93 = por %p91, %p92
      %s95 = sadd.s32 %s94, 1
      %p98 = scmp.eq.s32.totalorder %s18, 1
      %p99 = scmp.ne.s32.totalorder %s94, %s96
      %p100 = scmp.eq.s32.totalorder %s18, 0
      %p101 = por %p99, %p100
      %p102 = scmp.ne.s32.totalorder %s94, %s96
      %p103 = scmp.eq.s32.totalorder %s23, 1
      %p104 = por %p102, %p103
      %p105 = scmp.ne.s32.totalorder %s96, %s97
      %p106 = scmp.eq.s32.totalorder %s23, 0
      %p107 = por %p105, %p106
      %p108 = scmp.ne.s32.totalorder %s96, %s97
      %p109 = scmp.eq.s32.totalorder %s24, 1
      %p110 = por %p108, %p109
      %p112 = scmp.ne.s32.totalorder %s97, %s111
      %p113 = scmp.eq.s32.totalorder %s24, 0
      %p114 = por %p112, %p113
      %s116 = sadd.s32 %s115, 1
      %p119 = scmp.eq.s32.totalorder %s18, 1
      %p120 = scmp.ne.s32.totalorder %s115, %s117
      %p121 = scmp.eq.s32.totalorder %s18, 0
      %p122 = por %p120, %p121
      %p123 = scmp.ne.s32.totalorder %s115, %s117
      %p124 = scmp.eq.s32.totalorder %s23, 1
      %p125 = por %p123, %p124
      %p126 = scmp.ne.s32.totalorder %s117, %s118
      %p127 = scmp.eq.s32.totalorder %s23, 0
      %p128 = por %p126, %p127
      %p129 = scmp.ne.s32.totalorder %s117, %s118
      %p130 = scmp.eq.s32.totalorder %s24, 1
      %p131 = por %p129, %p130
      %p133 = scmp.ne.s32.totalorder %s118, %s132
      %p134 = scmp.eq.s32.totalorder %s24, 0
      %p135 = por %p133, %p134
      %s136 = ssub.s32 %s18, %s25
      %p137 = scmp.eq.s32.totalorder %s136, 0
      %s139 = sadd.s32 %s138, 1
      %s140 = scalar_select %p137, %s138, %s139
      %p143 = pneg %p137
      %p144 = scmp.eq.s32.totalorder %s18, 1
      %p145 = por %p143, %p144
      %p146 = scmp.ne.s32.totalorder %s138, %s141
      %p147 = scmp.eq.s32.totalorder %s18, 0
      %p148 = por %p146, %p147
      %p149 = scmp.ne.s32.totalorder %s138, %s141
      %p150 = scmp.eq.s32.totalorder %s23, 1
      %p151 = por %p149, %p150
      %p152 = scmp.ne.s32.totalorder %s141, %s142
      %p153 = scmp.eq.s32.totalorder %s23, 0
      %p154 = por %p152, %p153
      %p155 = scmp.ne.s32.totalorder %s141, %s142
      %p156 = scmp.eq.s32.totalorder %s24, 1
      %p157 = por %p155, %p156
      %p159 = scmp.ne.s32.totalorder %s142, %s158
      %p160 = scmp.eq.s32.totalorder %s24, 0
      %p161 = por %p159, %p160
      %p162 = scmp.le.s32.totalorder 1, %s18
      %p163 = scmp.lt.s32.totalorder %s18, 3
      %p164 = pnand %p162, %p163
      %p165 = pneg %p164
      // Predicated region
      $region9: #{tpu_custom_call.1} parent=5 // pred_check
        _
      $region10: #{tpu_custom_call.1} parent=5 // pred_check_branch
        %167 = sbr.rel (%p164) target = $region12
      $region11: #{tpu_custom_call.1} parent=5 // pred_region
        %s168 = ssub.s32 %s18, 1
        // Predicated region
        $region13: #{tpu_custom_call.1} parent=11 // pred_check
          %p169 = pneg %p65
        $region14: #{tpu_custom_call.1} parent=11 // pred_check_branch
          %171 = sbr.rel (%p169) target = $region16
        $region15: #{tpu_custom_call.1} parent=11 // pred_region
          %s173 = ssub.s32 512, 512
          %174 = vsyncadd [#allocation6], %s173
          %s175 = sshll.u32 [#allocation5], 4
          %s176 = int_to_ptr.vmem [resolvable:$true] %s175
          %181 = dma.hbm_to_vmem [thread:$0]  %s1, 512, %s176, [#allocation6], 128, 128, 8
        $region16: #{tpu_custom_call.1} parent=11 // pred_fallthru
          _
        // Predicated region
        $region17: #{tpu_custom_call.1} parent=11 // pred_check
          %p182 = pneg %p86
        $region18: #{tpu_custom_call.1} parent=11 // pred_check_branch
          %184 = sbr.rel (%p182) target = $region20
        $region19: #{tpu_custom_call.1} parent=11 // pred_region
          _
        $region20: #{tpu_custom_call.1} parent=11 // pred_fallthru
          _
        // Predicated region
        $region21: #{tpu_custom_call.1} parent=11 // pred_check
          %p185 = pneg %p107
        $region22: #{tpu_custom_call.1} parent=11 // pred_check_branch
          %187 = sbr.rel (%p185) target = $region24
        $region23: #{tpu_custom_call.1} parent=11 // pred_region
          %s189 = ssub.s32 512, 512
          %190 = vsyncadd [#allocation6], %s189
          %s191 = sshll.u32 [#allocation7], 4
          %s192 = int_to_ptr.vmem [resolvable:$true] %s191
          %197 = dma.hbm_to_vmem [thread:$0]  %s3, 512, %s192, [#allocation6], 128, 128, 8
        $region24: #{tpu_custom_call.1} parent=11 // pred_fallthru
          _
        // Predicated region
        $region25: #{tpu_custom_call.1} parent=11 // pred_check
          %p198 = pneg %p128
        $region26: #{tpu_custom_call.1} parent=11 // pred_check_branch
          %200 = sbr.rel (%p198) target = $region28
        $region27: #{tpu_custom_call.1} parent=11 // pred_region
          _
        $region28: #{tpu_custom_call.1} parent=11 // pred_fallthru
          _
      $region12: #{tpu_custom_call.1} parent=5 // pred_fallthru
        _
      %p201 = scmp.lt.s32.totalorder %s18, 2
      // Predicated region
      $region29: #{tpu_custom_call.1} parent=5 // pred_check
        %p202 = pneg %p201
      $region30: #{tpu_custom_call.1} parent=5 // pred_check_branch
        %204 = sbr.rel (%p202) target = $region32
      $region31: #{tpu_custom_call.1} parent=5 // pred_region
        // Predicated region
        $region33: #{tpu_custom_call.1} parent=31 // pred_check
          %p205 = pneg %p38
        $region34: #{tpu_custom_call.1} parent=31 // pred_check_branch
          %207 = sbr.rel (%p205) target = $region36
        $region35: #{tpu_custom_call.1} parent=31 // pred_region
          %s208 = sand.u32 %s28, 1
          %s209 = scalar_lea.sflag [#allocation3], %s208
          %s210 = sand.u32 %s28, 1
          %s211 = smul.addr %s210, 8
          %s212 = scalar_lea.vmem [#allocation2], %s211
          %s214 = ssub.s32 128, 128
          %215 = vsyncadd %s209, %s214
          %s216 = smul.addr %s18, 128
          %s217 = scalar_lea.hbm %s0, %s216
          %s219 = sshll.u32 %s212, 4
          %s220 = int_to_ptr.vmem [resolvable:$true] %s219
          %222 = dma.hbm_to_vmem [thread:$0]  %s217, 128, %s220, %s209
        $region36: #{tpu_custom_call.1} parent=31 // pred_fallthru
          _
      $region32: #{tpu_custom_call.1} parent=5 // pred_fallthru
        _
      %p223 = scmp.le.s32.totalorder 1, %s18
      %p224 = scmp.lt.s32.totalorder %s18, 3
      %p225 = pnand %p223, %p224
      %p226 = pneg %p225
      // Predicated region
      $region37: #{tpu_custom_call.1} parent=5 // pred_check
        _
      $region38: #{tpu_custom_call.1} parent=5 // pred_check_branch
        %228 = sbr.rel (%p225) target = $region40
      $region39: #{tpu_custom_call.1} parent=5 // pred_region
        %s229 = ssub.s32 %s18, 1
        %s230 = sand.u32 %s31, 1
        %s231 = scalar_lea.sflag [#allocation3], %s230
        %s232 = sand.u32 %s31, 1
        %s233 = smul.addr %s232, 8
        %s234 = scalar_lea.vmem [#allocation2], %s233
        // Predicated region
        $region41: #{tpu_custom_call.1} parent=39 // pred_check
          %p235 = pneg %p44
        $region42: #{tpu_custom_call.1} parent=39 // pred_check_branch
          %237 = sbr.rel (%p235) target = $region44
        $region43: #{tpu_custom_call.1} parent=39 // pred_region
          %238 = dma.done %s231, 128
        $region44: #{tpu_custom_call.1} parent=39 // pred_fallthru
          _
        // Predicated region
        $region45: #{tpu_custom_call.1} parent=39 // pred_check
          %p239 = pneg %p65
        $region46: #{tpu_custom_call.1} parent=39 // pred_check_branch
          %241 = sbr.rel (%p239) target = $region48
        $region47: #{tpu_custom_call.1} parent=39 // pred_region
          %242 = dma.done [#allocation6], 512
        $region48: #{tpu_custom_call.1} parent=39 // pred_fallthru
          _
        // Predicated region
        $region49: #{tpu_custom_call.1} parent=39 // pred_check
          %p243 = pneg %p107
        $region50: #{tpu_custom_call.1} parent=39 // pred_check_branch
          %245 = sbr.rel (%p243) target = $region52
        $region51: #{tpu_custom_call.1} parent=39 // pred_region
          %246 = dma.done [#allocation6], 512
        $region52: #{tpu_custom_call.1} parent=39 // pred_fallthru
          _
        %s247 = sand.u32 %s31, 1
        %s248 = scalar_lea.sflag [#allocation3], %s247
        %s249 = sand.u32 %s31, 1
        %s250 = smul.addr %s249, 8
        %s251 = scalar_lea.vmem [#allocation2], %s250
        %p252 = pneg %p44
        %p253 = pneg %p41
        %p254 = pneg %p65
        %p255 = pneg %p62
        %p256 = pneg %p86
        %p257 = pneg %p83
        %p258 = pneg %p107
        %p259 = pneg %p104
        %p260 = pneg %p128
        %p261 = pneg %p125
        %p262 = pneg %p154
        %p263 = pneg %p151
        %s264 = sand.u32 %s141, 1
        %s265 = scalar_lea.sflag [#allocation4], %s264
        %s266 = sand.u32 %s141, 1
        %s267 = smul.addr %s266, 8
        %s268 = scalar_lea.vmem [#allocation8], %s267
        %v269 = vld [vmem:[%s2] sm:$0x7]
        %v270 = vld [vmem:[%s234] sm:$0xff]
        %v271 = vld [vmem:[#allocation5] sm:$0xff]
        %v272 = vld [vmem:[#allocation5 + $0x8] sm:$0xff]
        %v273 = vld [vmem:[#allocation5 + $0x10] sm:$0xff]
        %v274 = vld [vmem:[#allocation5 + $0x18] sm:$0xff]
        %v275 = vlaneseq
        %v276 = vshrl.u32 %v275, 7
        %v277 = vsub.s32 0, %v276
        %v278 = vrot.slane %v269, %v277
        %vm279 = vcmask 261120
        %v281 = vsel %vm279, %v270, 0
        %283 = vmatprep.subr.mxu0 0.0
        %284 = vmatpush1.msra.mxu0 %v271
        %285 = vmatprep.subr.mxu0 0.0
        %286 = vmatpush1.msra.mxu0 %v272
        %287 = vmatprep.subr.mxu0 0.0
        %288 = vmatpush1.msra.mxu0 %v273
        %289 = vmatprep.subr.mxu0 0.0
        %290 = vmatpush1.msra.mxu0 %v274
        %291 = vmatprep.subr.mxu0 0.0
        %292 = vmatpush1.msra.mxu0 0.0
        %293 = vmatprep.subr.mxu0 0.0
        %294 = vmatpush1.msra.mxu0 0.0
        %295 = vmatprep.subr.mxu0 0.0
        %296 = vmatpush1.msra.mxu0 0.0
        %297 = vmatprep.subr.mxu0 0.0
        %298 = vmatpush1.msra.mxu0 0.0
        %299 = vmatprep.subr.mxu0 0.0
        %300 = vmatpush1.msra.mxu0 0.0
        %301 = vmatprep.subr.mxu0 0.0
        %302 = vmatpush1.msra.mxu0 0.0
        %303 = vmatprep.subr.mxu0 0.0
        %304 = vmatpush1.msra.mxu0 0.0
        %305 = vmatprep.subr.mxu0 0.0
        %306 = vmatpush1.msra.mxu0 0.0
        %307 = vmatprep.subr.mxu0 0.0
        %308 = vmatpush1.msra.mxu0 0.0
        %309 = vmatprep.subr.mxu0 0.0
        %310 = vmatpush1.msra.mxu0 0.0
        %311 = vmatprep.subr.mxu0 0.0
        %312 = vmatpush1.msra.mxu0 0.0
        %313 = vmatprep.subr.mxu0 0.0
        %314 = vmatpush1.msra.mxu0 0.0
        %315 = vmatprep.subr.mxu0 0.0
        %316 = vmatpush1.msra.mxu0 0.0
        %317 = vmatprep.subr.mxu0 0.0
        %318 = vmatpush1.msra.mxu0 0.0
        %319 = vmatprep.subr.mxu0 0.0
        %320 = vmatpush1.msra.mxu0 0.0
        %321 = vmatprep.subr.mxu0 0.0
        %322 = vmatpush1.msra.mxu0 0.0
        %323 = vmatprep.subr.mxu0 0.0
        %324 = vmatpush1.msra.mxu0 0.0
        %325 = vmatprep.subr.mxu0 0.0
        %326 = vmatpush1.msra.mxu0 0.0
        %327 = vmatprep.subr.mxu0 0.0
        %328 = vmatpush1.msra.mxu0 0.0
        %329 = vmatprep.subr.mxu0 0.0
        %330 = vmatpush1.msra.mxu0 0.0
        %331 = vmatprep.subr.mxu0 0.0
        %332 = vmatpush1.msra.mxu0 0.0
        %333 = vmatprep.subr.mxu0 0.0
        %334 = vmatpush1.msra.mxu0 0.0
        %335 = vmatprep.subr.mxu0 0.0
        %336 = vmatpush1.msra.mxu0 0.0
        %337 = vmatprep.subr.mxu0 0.0
        %338 = vmatpush1.msra.mxu0 0.0
        %339 = vmatprep.subr.mxu0 0.0
        %340 = vmatpush1.msra.mxu0 0.0
        %341 = vmatprep.subr.mxu0 0.0
        %342 = vmatpush1.msra.mxu0 0.0
        %343 = vmatprep.subr.mxu0 0.0
        %344 = vmatpush1.msra.mxu0 0.0
        %345 = vmatprep.subr.mxu0 0.0
        %346 = vmatpush1.msra.mxu0 0.0
        %347 = vmatprep.mubr.f32.mxu0 0.0
        %348 = vmatmul.mubr.f32.gmra.mrb[0].mxu0 %v281
        %v349 = vpop.f32.mrb[0].mxu0
        %v350 = vadd.f32 %v278, %v349
        %v351 = vpop.f32.mrb[0].mxu0
        %352 = vdwg.mxu0
        %v353 = vmul.f32 %v350, 0.5
        %v354 = vmul.f32 %v350, 0.70710677
        %v355 = verf.f32.pop %v354
        %v356 = vadd.f32 %v355, 1.0
        %v357 = vmul.f32 %v353, %v356
        %v358 = vsel %vm279, %v357, 0.0
        %359 = vadd.xlane.f32.xlu0 %v358
        %v360 = vpop.xlane.xlu0 %359
        %v361 = vrcp.pop 32.0
        %v362 = vmul.f32 %v360, %v361
        %v363 = vsub.f32 %v357, %v362
        %v364 = vmul.f32 %v363, %v363
        %v365 = vsel %vm279, %v364, 0.0
        %366 = vadd.xlane.f32.xlu0 %v365
        %v367 = vpop.xlane.xlu0 %366
        %v368 = vmul.f32 %v367, %v361
        %v369 = vadd.f32 %v368, 1e-12
        %v370 = vrsqrt.pop %v369
        %v371 = vmul.f32 %v363, %v370
        %v372 = vlaneseq
        %v373 = vshrl.u32 %v372, 7
        %v374 = vsub.s32 1, %v373
        %v375 = vrot.slane %v269, %v374
        %v376 = vmul.f32 %v371, %v375
        %v377 = vlaneseq
        %v378 = vshrl.u32 %v377, 7
        %v379 = vsub.s32 2, %v378
        %v380 = vrot.slane %v269, %v379
        %v381 = vadd.f32 %v376, %v380
        %v382 = vld [vmem:[#allocation7] sm:$0xff]
        %v383 = vld [vmem:[#allocation7 + $0x8] sm:$0xff]
        %v384 = vld [vmem:[#allocation7 + $0x10] sm:$0xff]
        %v385 = vld [vmem:[#allocation7 + $0x18] sm:$0xff]
        %v386 = vld [vmem:[%s4] sm:$0x1]
        %v388 = vlaneseq
        %v389 = vshrl.u32 %v388, 7
        %v390 = vsub.s32 0, %v389
        %v391 = vrot.slane %v386, %v390
        %v394 = vsel %vm279, %v381, 0
        %396 = vmatprep.subr.mxu0 0.0
        %397 = vmatpush1.msra.mxu0 %v382
        %398 = vmatprep.subr.mxu0 0.0
        %399 = vmatpush1.msra.mxu0 %v383
        %400 = vmatprep.subr.mxu0 0.0
        %401 = vmatpush1.msra.mxu0 %v384
        %402 = vmatprep.subr.mxu0 0.0
        %403 = vmatpush1.msra.mxu0 %v385
        %404 = vmatprep.subr.mxu0 0.0
        %405 = vmatpush1.msra.mxu0 0.0
        %406 = vmatprep.subr.mxu0 0.0
        %407 = vmatpush1.msra.mxu0 0.0
        %408 = vmatprep.subr.mxu0 0.0
        %409 = vmatpush1.msra.mxu0 0.0
        %410 = vmatprep.subr.mxu0 0.0
        %411 = vmatpush1.msra.mxu0 0.0
        %412 = vmatprep.subr.mxu0 0.0
        %413 = vmatpush1.msra.mxu0 0.0
        %414 = vmatprep.subr.mxu0 0.0
        %415 = vmatpush1.msra.mxu0 0.0
        %416 = vmatprep.subr.mxu0 0.0
        %417 = vmatpush1.msra.mxu0 0.0
        %418 = vmatprep.subr.mxu0 0.0
        %419 = vmatpush1.msra.mxu0 0.0
        %420 = vmatprep.subr.mxu0 0.0
        %421 = vmatpush1.msra.mxu0 0.0
        %422 = vmatprep.subr.mxu0 0.0
        %423 = vmatpush1.msra.mxu0 0.0
        %424 = vmatprep.subr.mxu0 0.0
        %425 = vmatpush1.msra.mxu0 0.0
        %426 = vmatprep.subr.mxu0 0.0
        %427 = vmatpush1.msra.mxu0 0.0
        %428 = vmatprep.subr.mxu0 0.0
        %429 = vmatpush1.msra.mxu0 0.0
        %430 = vmatprep.subr.mxu0 0.0
        %431 = vmatpush1.msra.mxu0 0.0
        %432 = vmatprep.subr.mxu0 0.0
        %433 = vmatpush1.msra.mxu0 0.0
        %434 = vmatprep.subr.mxu0 0.0
        %435 = vmatpush1.msra.mxu0 0.0
        %436 = vmatprep.subr.mxu0 0.0
        %437 = vmatpush1.msra.mxu0 0.0
        %438 = vmatprep.subr.mxu0 0.0
        %439 = vmatpush1.msra.mxu0 0.0
        %440 = vmatprep.subr.mxu0 0.0
        %441 = vmatpush1.msra.mxu0 0.0
        %442 = vmatprep.subr.mxu0 0.0
        %443 = vmatpush1.msra.mxu0 0.0
        %444 = vmatprep.subr.mxu0 0.0
        %445 = vmatpush1.msra.mxu0 0.0
        %446 = vmatprep.subr.mxu0 0.0
        %447 = vmatpush1.msra.mxu0 0.0
        %448 = vmatprep.subr.mxu0 0.0
        %449 = vmatpush1.msra.mxu0 0.0
        %450 = vmatprep.subr.mxu0 0.0
        %451 = vmatpush1.msra.mxu0 0.0
        %452 = vmatprep.subr.mxu0 0.0
        %453 = vmatpush1.msra.mxu0 0.0
        %454 = vmatprep.subr.mxu0 0.0
        %455 = vmatpush1.msra.mxu0 0.0
        %456 = vmatprep.subr.mxu0 0.0
        %457 = vmatpush1.msra.mxu0 0.0
        %458 = vmatprep.subr.mxu0 0.0
        %459 = vmatpush1.msra.mxu0 0.0
        %460 = vmatprep.mubr.f32.mxu0 0.0
        %461 = vmatmul.mubr.f32.gmra.mrb[0].mxu0 %v394
        %v462 = vpop.f32.mrb[0].mxu0
        %v463 = vadd.f32 %v391, %v462
        %v464 = vpop.f32.mrb[0].mxu0
        %465 = vdwg.mxu0
        %466 = vst [vmem:[%s268] sm:$0xff] %v463
        %s467 = sand.u32 %s141, 1
        %s468 = scalar_lea.sflag [#allocation4], %s467
        %s469 = sand.u32 %s141, 1
        %s470 = smul.addr %s469, 8
        %s471 = scalar_lea.vmem [#allocation8], %s470
        // Predicated region
        $region53: #{tpu_custom_call.1} parent=39 // pred_check
          %p472 = pneg %p151
        $region54: #{tpu_custom_call.1} parent=39 // pred_check_branch
          %474 = sbr.rel (%p472) target = $region56
        $region55: #{tpu_custom_call.1} parent=39 // pred_region
          %s476 = ssub.s32 128, 128
          %477 = vsyncadd %s468, %s476
          %s478 = smul.addr %s23, 128
          %s479 = scalar_lea.hbm %s5, %s478
          %s481 = sshll.u32 %s471, 4
          %s482 = int_to_ptr.vmem [resolvable:$true] %s481
          %484 = dma.vmem_to_hbm [thread:$0]  %s482, 128, %s479, %s468
        $region56: #{tpu_custom_call.1} parent=39 // pred_fallthru
          _
      $region40: #{tpu_custom_call.1} parent=5 // pred_fallthru
        _
      %p485 = scmp.le.s32.totalorder 2, %s18
      // Predicated region
      $region57: #{tpu_custom_call.1} parent=5 // pred_check
        %p486 = pneg %p485
      $region58: #{tpu_custom_call.1} parent=5 // pred_check_branch
        %488 = sbr.rel (%p486) target = $region60
      $region59: #{tpu_custom_call.1} parent=5 // pred_region
        %s489 = ssub.s32 %s18, 2
        // Predicated region
        $region61: #{tpu_custom_call.1} parent=59 // pred_check
          %p490 = pneg %p157
        $region62: #{tpu_custom_call.1} parent=59 // pred_check_branch
          %492 = sbr.rel (%p490) target = $region64
        $region63: #{tpu_custom_call.1} parent=59 // pred_region
          %s493 = sand.u32 %s142, 1
          %s494 = scalar_lea.sflag [#allocation4], %s493
          %s495 = sand.u32 %s142, 1
          %s496 = smul.addr %s495, 8
          %s497 = scalar_lea.vmem [#allocation8], %s496
          %498 = dma.done %s494, 128
        $region64: #{tpu_custom_call.1} parent=59 // pred_fallthru
          _
      $region60: #{tpu_custom_call.1} parent=5 // pred_fallthru
        _
    $region6: #{tpu_custom_call.1} parent=1 // loop_footer
      %s22 = sadd.s32 1, %s18
    $region7: #{tpu_custom_call.1} parent=1 // loop_footer_branch
      %17 = sbr.rel target = $region3
    $region8: #{tpu_custom_call.1} parent=1 // loop_exit
      _
    %499 = vsyncpa [#allocation3], 1
    %s500 = scalar_lea.sflag [#allocation3], 1
    %501 = vsyncpa %s500, 1
    %502 = vsyncpa [#allocation6], 1
    %503 = vsyncpa [#allocation4], 1
    %s504 = scalar_lea.sflag [#allocation4], 1
    %505 = vsyncpa %s504, 1

</llo_original>
